<compile_context>
chip_gen: v6e
topology: v6e:2x2x1
jax: 0.10.0
libtpu: 0.0.40
codegen_flags: <defaults>
</compile_context>

<pallas_src>
import functools

import jax
import jax.numpy as jnp
from jax import lax
from jax.experimental import pallas as pl
from jax.experimental.pallas import tpu as pltpu


_IN_BLOCK_TARGET_BYTES = 8 * 1024 * 1024   # per input block (Pallas double-buffers)
_OUT_TILE_MAX_BYTES = 4 * 1024 * 1024      # resident f32 accumulator tile (soft cap)
_VMEM_LIMIT_BYTES = 40 * 1024 * 1024       # 2x8MiB in + 2x4MiB out + headroom


def _cdiv(a: int, b: int) -> int:
    return -(-a // b)


def _round_up(x: int, m: int) -> int:
    return ((x + m - 1) // m) * m


def _sublane_align(dtype) -> int:
    """Second-minor tile granule: f32 -> 8, bf16/f16 -> 16, int8/fp8 -> 32."""
    return max(8, 32 // jnp.dtype(dtype).itemsize)


def _pick_block(extent: int, target: int, align: int) -> int:
    """Block size for a NON-reduced axis.

    Full extent if it fits; else prefer an aligned exact divisor near target;
    else the largest aligned value <= target (ragged tail tolerated: padded
    input only feeds output rows that are never written back).
    """
    if extent <= target:
        return extent
    t = max(align, (target // align) * align)
    s = t
    while s >= align and 2 * s >= t:
        if extent % s == 0:
            return s
        s -= align
    return min(t, extent)


def _pick_reduce_block(extent: int, target: int, align: int):
    """Block size for the reduced (sublane/lane) axis -> (block, needs_mask)."""
    if extent <= target:
        return extent, False
    t = max(align, (target // align) * align)
    s = t
    while s >= align and 2 * s >= t:
        if extent % s == 0:
            return s, False
        s -= align
    return min(t, extent), True   # ragged tail -> masked inside the kernel


def _largest_divisor_leq(extent: int, target: int) -> int:
    t = max(1, min(extent, target))
    while extent % t != 0:
        t -= 1
    return t


def _maybe_halve(extent: int, block: int, align: int) -> int:
    """Shrink `block` so the axis spans >= 2 blocks (v7x megacore coverage)."""
    if block < extent:
        return block
    half = _round_up((extent + 1) // 2, align)
    if align <= half < extent:
        return half
    return block


def _sum_last_axis(x):
    """Sum over the lane axis: VPU pre-accumulation of 128-lane groups, then a
    single cross-lane (XLU) reduce per block."""
    n = x.shape[-1]
    ng = n // 128
    if ng <= 1:
        return jnp.sum(x, axis=-1)
    acc = x[..., 0:128]
    for g in range(1, ng):
        acc = acc + x[..., g * 128:(g + 1) * 128]
    total = jnp.sum(acc, axis=-1)
    rem = n - ng * 128
    if rem:
        total = total + jnp.sum(x[..., ng * 128:], axis=-1)
    return total


def _mean_kernel(x_ref, o_ref, *, reduce_axis, inv_k, nk, k_total, tk, mask_tail):
    k = pl.program_id(2)
    x = x_ref[...].astype(jnp.float32)

    if mask_tail:
        # Ragged tail on the reduced axis: zero out-of-range elements.
        offs = k * tk + lax.broadcasted_iota(jnp.int32, x.shape, reduce_axis)
        x = jnp.where(offs < k_total, x, 0.0)

    if reduce_axis == 2:
        partial = _sum_last_axis(x)
    else:
        partial = jnp.sum(x, axis=reduce_axis)

    if nk == 1:
        o_ref[...] = partial * inv_k
    else:
        @pl.when(k == 0)
        def _():
            o_ref[...] = partial

        @pl.when(jnp.logical_and(k > 0, k < nk - 1))
        def _():
            o_ref[...] = o_ref[...] + partial

        @pl.when(k == nk - 1)
        def _():
            o_ref[...] = (o_ref[...] + partial) * inv_k


def mean_reduction(x: jax.Array, dim: int) -> jax.Array:
    """Pallas equivalent of mean_reduction_cuda(x, dim) for a 3-D tensor."""
    assert x.ndim == 3, "mean_reduction expects a 3-D input"
    assert dim in (0, 1, 2)
    B, D1, D2 = x.shape
    itemsize = jnp.dtype(x.dtype).itemsize
    salign = _sublane_align(x.dtype)
    budget = max(1, _IN_BLOCK_TARGET_BYTES // itemsize)   # elems per input block
    out_cap = max(1, _OUT_TILE_MAX_BYTES // 4)            # elems per f32 out tile
    mask_tail = False

    if dim == 0:
        # out[d1, d2] = mean_b x[b, d1, d2]; reduce over the leading axis.
        K = B
        tn = _pick_block(D2, max(128, budget // salign), 128)                 # lane
        tm = _pick_block(D1, max(salign, min(budget // tn, out_cap // tn)), salign)
        if _cdiv(D1, tm) * _cdiv(D2, tn) == 1:                                # megacore
            tm2 = _maybe_halve(D1, tm, salign)
            if tm2 != tm:
                tm = tm2
            else:
                tn = _maybe_halve(D2, tn, 128)
        tk = _largest_divisor_leq(K, max(1, budget // (tm * tn)))             # leading
        grid = (_cdiv(D1, tm), _cdiv(D2, tn), _cdiv(K, tk))
        in_spec = pl.BlockSpec((tk, tm, tn), lambda i, j, k: (k, i, j))
        out_shape = jax.ShapeDtypeStruct((D1, D2), jnp.float32)
        out_spec = pl.BlockSpec((tm, tn), lambda i, j, k: (i, j))
        reduce_axis, tk_red = 0, tk

    elif dim == 1:
        # out[b, d2] = mean_d1 x[b, d1, d2]; reduce over the sublane axis.
        K = D1
        tb_min = min(B, 8)
        tn = _pick_block(D2, max(128, budget // (tb_min * salign)), 128)      # lane
        tk, mask_tail = _pick_reduce_block(
            K, max(salign, budget // (tb_min * tn)), salign)                  # sublane
        tb = _pick_block(B, max(tb_min, min(budget // (tk * tn), out_cap // tn)), 8)
        if _cdiv(B, tb) * _cdiv(D2, tn) == 1:                                 # megacore
            tb2 = _maybe_halve(B, tb, 8)
            if tb2 != tb:
                tb = tb2
            else:
                tn = _maybe_halve(D2, tn, 128)
        grid = (_cdiv(B, tb), _cdiv(D2, tn), _cdiv(K, tk))
        in_spec = pl.BlockSpec((tb, tk, tn), lambda i, j, k: (i, k, j))
        out_shape = jax.ShapeDtypeStruct((B, D2), jnp.float32)
        out_spec = pl.BlockSpec((tb, tn), lambda i, j, k: (i, j))
        reduce_axis, tk_red = 1, tk

    else:
        # out[b, d1] = mean_d2 x[b, d1, d2]; reduce over the lane axis.
        K = D2
        tb_min = min(B, 8)
        tm_min = min(D1, 128)
        tk, mask_tail = _pick_reduce_block(
            K, max(128, budget // (tb_min * tm_min)), 128)                    # lane
        tm = _pick_block(
            D1, max(tm_min, min(budget // (tb_min * tk), out_cap // tb_min)), 128)
        tb = _pick_block(B, max(tb_min, min(budget // (tm * tk), out_cap // tm)), 8)
        if _cdiv(B, tb) * _cdiv(D1, tm) == 1:                                 # megacore
            tb2 = _maybe_halve(B, tb, 8)
            if tb2 != tb:
                tb = tb2
            else:
                tm = _maybe_halve(D1, tm, 128)
        grid = (_cdiv(B, tb), _cdiv(D1, tm), _cdiv(K, tk))
        in_spec = pl.BlockSpec((tb, tm, tk), lambda i, j, k: (i, j, k))
        out_shape = jax.ShapeDtypeStruct((B, D1), jnp.float32)
        out_spec = pl.BlockSpec((tb, tm), lambda i, j, k: (i, j))
        reduce_axis, tk_red = 2, tk

    kernel = functools.partial(
        _mean_kernel,
        reduce_axis=reduce_axis,
        inv_k=1.0 / K,
        nk=grid[2],
        k_total=K,
        tk=tk_red,
        mask_tail=mask_tail,
    )

    out_elems = 1
    for s in out_shape.shape:
        out_elems *= s
    cost = pl.CostEstimate(
        flops=int(x.size),
        transcendentals=0,
        bytes_accessed=int(x.size * itemsize + out_elems * 4),
    )

    return pl.pallas_call(
        kernel,
        out_shape=out_shape,
        grid=grid,
        in_specs=[in_spec],
        out_specs=out_spec,
        compiler_params=pltpu.CompilerParams(
            dimension_semantics=("parallel", "parallel", "arbitrary"),
            vmem_limit_bytes=_VMEM_LIMIT_BYTES,
        ),
        cost_estimate=cost,
    )(x)


class ModelNew:
    """JAX/Pallas port of the PyTorch ModelNew (mean reduction over `dim`)."""

    def __init__(self, dim: int):
        self.dim = dim
        self._fn = jax.jit(functools.partial(mean_reduction, dim=dim))

    def __call__(self, x: jax.Array) -> jax.Array:
        return self._fn(x)


if __name__ == "__main__":
    key = jax.random.PRNGKey(0)
    # Small shapes consistent with the module: (batch, dim1, dim2)
    shapes = [(2, 8, 16), (4, 16, 256)]

    ok = True
    for shape in shapes:
        key, sub = jax.random.split(key)
        x = jax.random.normal(sub, shape, dtype=jnp.float32)
        for d in (0, 1, 2):
            model = ModelNew(dim=d)
            out = jax.block_until_ready(model(x))
            ref = jnp.mean(x, axis=d)
            if (out.shape != ref.shape or out.dtype != jnp.float32
                    or not jnp.allclose(out, ref, atol=1e-5, rtol=1e-5)):
                ok = False
                print(f"MISMATCH shape={shape} dim={d}")

    if ok:
        print("KERNEL_OK")
</pallas_src>

<mosaic_0001>
module attributes {stable_mosaic.version = 11 : i64} {
  func.func @_mean_kernel(%arg0: i32, %arg1: i32, %arg2: i32, %arg3: memref<2x8x16xf32, #tpu.memory_space<vmem>>, %arg4: memref<8x16xf32, #tpu.memory_space<vmem>>) attributes {dimension_semantics = [#tpu.dimension_semantics<parallel>, #tpu.dimension_semantics<parallel>, #tpu.dimension_semantics<arbitrary>], iteration_bounds = array<i64: 1, 1, 1>, scalar_prefetch = 0 : i64, scratch_operands = 0 : i64, tpu.core_type = #tpu.core_type<tc>, window_params = [{transform_indices = @transform_0, window_bounds = array<i64: 2, 8, 16>}, {transform_indices = @transform_1, window_bounds = array<i64: 8, 16>}]} {
    %c0 = arith.constant 0 : index
    %c0_0 = arith.constant 0 : index
    %c0_1 = arith.constant 0 : index
    %0 = vector.load %arg3[%c0, %c0_0, %c0_1] : memref<2x8x16xf32, #tpu.memory_space<vmem>>, vector<2x8x16xf32>
    %cst = arith.constant dense<0.000000e+00> : vector<8x16xf32>
    %1 = vector.multi_reduction <add>, %0, %cst [0] : vector<2x8x16xf32> to vector<8x16xf32>
    %cst_2 = arith.constant 5.000000e-01 : f32
    %2 = vector.broadcast %cst_2 : f32 to vector<8x16xf32>
    %3 = arith.mulf %1, %2 : vector<8x16xf32>
    %c0_3 = arith.constant 0 : index
    %c0_4 = arith.constant 0 : index
    %4 = vector.load %arg4[%c0_3, %c0_4] : memref<8x16xf32, #tpu.memory_space<vmem>>, vector<8x16xf32>
    tpu.vector_store %arg4[%c0_3, %c0_4], %3 {strides = array<i32>} : memref<8x16xf32, #tpu.memory_space<vmem>>, vector<8x16xf32>,
    return
  }
  func.func @transform_0(%arg0: i32, %arg1: i32, %arg2: i32) -> (i32, i32, i32) {
    %c0_i32 = arith.constant 0 : i32
    return %arg2, %arg0, %arg1 : i32, i32, i32
  }
  func.func @transform_1(%arg0: i32, %arg1: i32, %arg2: i32) -> (i32, i32) {
    %c0_i32 = arith.constant 0 : i32
    return %arg0, %arg1 : i32, i32
  }
}

</mosaic_0001>

<llo_original>
// kernel: mean_reduction.1
$region0: #{mean_reduction.1}
  #allocation0 [shape = 'u32[]', space=smem, size = 0x4, offset = 0x4, fixed_abs, tag = 'smem constant byte address 0x4 - core index']
  #allocation1 [shape = 'u32[144,128]{1,0:T(1,128)}', space=vmem, size = 0x12000, scoped, tag = 'internal scratch']
  %s0 = inlined_call_operand.hbm [shape: f32[2,8,16], index: 0, kind: input, shape index: {}]
  %s1 = inlined_call_operand.hbm [shape: f32[8,16], index: 1, kind: output, shape index: {}]
  %s2 = sld [smem:[#allocation0]]
  $region18: #{mean_reduction.1} parent=0
    _
  %s4 = ssub.s32 1, %s2
  %s5 = scalar_select 0, %s4, %s2
  $region1: #{mean_reduction.1} parent=0
    #allocation2 [shape = 'u8[8192]{0}', space=vmem, size = 0x2000, scoped, tag = 'input window, operand 0, single buffered']
    #allocation3 [shape = 's32[1]{0}', space=sflag, size = 0x4, scoped, tag = 'scoped memory for mean_reduction.1']
    #allocation4 [shape = 's32[1]{0}', space=sflag, size = 0x4, scoped, tag = 'scoped memory for mean_reduction.1']
    #allocation5 [shape = 'u8[4096]{0}', space=vmem, size = 0x1000, scoped, tag = 'output window, operand 0, single buffered']
    %6 = vsyncpa [#allocation3], 0
    %7 = vsyncpa [#allocation4], 0
    // Predicated region
    $region2: #{mean_reduction.1} parent=1 // pred_check
      _
    $region3: #{mean_reduction.1} parent=1 // pred_check_branch
      %9 = sbr.rel (0) target = $region5
    $region4: #{mean_reduction.1} parent=1 // pred_region
      %s11 = ssub.s32 256, 256
      %12 = vsyncadd [#allocation3], %s11
      %s13 = sshll.u32 [#allocation2], 4
      %s14 = int_to_ptr.vmem [resolvable:$true] %s13
      %19 = dma.hbm_to_vmem [thread:$0]  %s0, 256, %s14, [#allocation3], 128, 128, 8
    $region5: #{mean_reduction.1} parent=1 // pred_fallthru
      _
    // Predicated region
    $region6: #{mean_reduction.1} parent=1 // pred_check
      _
    $region7: #{mean_reduction.1} parent=1 // pred_check_branch
      %21 = sbr.rel (0) target = $region9
    $region8: #{mean_reduction.1} parent=1 // pred_region
      %22 = dma.done [#allocation3], 256
    $region9: #{mean_reduction.1} parent=1 // pred_fallthru
      _
    %v23 = vld [vmem:[#allocation2] sm:$0xff]
    %v24 = vld [vmem:[#allocation2 + $0x8] sm:$0xff]
    %vm25 = vcmask 130048
    %v26 = vsel %vm25, %v23, 0.0
    %v27 = vsel %vm25, %v24, 0.0
    %v28 = vadd.f32 %v26, %v27
    %v29 = vmul.f32 %v28, 0.5
    %30 = vst.msk [vmem:[#allocation5] sm:$0xff] %vm25, %v29
    // Predicated region
    $region10: #{mean_reduction.1} parent=1 // pred_check
      _
    $region11: #{mean_reduction.1} parent=1 // pred_check_branch
      %32 = sbr.rel (0) target = $region13
    $region12: #{mean_reduction.1} parent=1 // pred_region
      %s34 = ssub.s32 128, 128
      %35 = vsyncadd [#allocation4], %s34
      %s37 = sshll.u32 [#allocation5], 4
      %s38 = int_to_ptr.vmem [resolvable:$true] %s37
      %40 = dma.vmem_to_hbm [thread:$0]  %s38, 128, %s1, [#allocation4]
    $region13: #{mean_reduction.1} parent=1 // pred_fallthru
      _
    // Predicated region
    $region14: #{mean_reduction.1} parent=1 // pred_check
      _
    $region15: #{mean_reduction.1} parent=1 // pred_check_branch
      %42 = sbr.rel (0) target = $region17
    $region16: #{mean_reduction.1} parent=1 // pred_region
      %43 = dma.done [#allocation4], 128
    $region17: #{mean_reduction.1} parent=1 // pred_fallthru
      _
    %44 = vsyncpa [#allocation3], 1
    %45 = vsyncpa [#allocation4], 1

</llo_original>
